<compile_context>
chip_gen: v5e
topology: v5e:2x2
jax: 0.10.0
libtpu: 0.0.40
codegen_flags: <defaults>
</compile_context>

<pallas_src>
import jax
import jax.numpy as jnp
from jax.experimental import pallas as pl
from jax.experimental.pallas import tpu as pltpu


def _round_up(x, m):
    return ((x + m - 1) // m) * m


def tail_kernel(x_ref, w1_ref, b1_ref, w2_ref, b2_ref, w3_ref,
                a1_ref, a2_ref, b3_ref, o_ref):
    # SMEM scalars.
    a1 = a1_ref[0]
    a2 = a2_ref[0]
    b3 = b3_ref[0]

    x = x_ref[...]                                       # (TM, D)

    # Layer 1: Linear(D, D) on the MXU (bf16 operands, f32 acc) + bias + PReLU.
    h = jnp.dot(x.astype(w1_ref.dtype), w1_ref[...],
                preferred_element_type=jnp.float32) + b1_ref[...]
    h = jnp.where(h > 0, h, a1 * h)

    # Layer 2: Linear(D, D) + PReLU.
    h = jnp.dot(h.astype(w2_ref.dtype), w2_ref[...],
                preferred_element_type=jnp.float32) + b2_ref[...]
    h = jnp.where(h > 0, h, a2 * h)

    # Layer 3: Linear(D, 1) as a VPU multiply + cross-lane reduce; produces a
    # lane-dense (TM,) row rather than a masked (TM, 1) column store.
    out = jnp.sum(h * w3_ref[...], axis=-1) + b3         # (TM,)
    o_ref[...] = out.reshape(o_ref.shape).astype(o_ref.dtype)


def bad_transformer_block_tail(x, params, *, tm=1024, matmul_dtype=jnp.bfloat16):
    """x: (B, S, D) float32 or bfloat16.  Returns (B, S) float32 (== .view(B, -1))."""
    B, S, D = x.shape
    M = B * S
    x2d = x.reshape(M, D)                                 # free reshape, no copy

    (w1, b1, a1, w2, b2, a2, w3, b3) = params
    if matmul_dtype is not None:
        # Only the resident weights are cast here (tiny, one-off); activations
        # are cast per-tile inside the kernel.
        w1 = w1.astype(matmul_dtype)
        w2 = w2.astype(matmul_dtype)

    x_bytes = jnp.dtype(x2d.dtype).itemsize
    w_bytes = jnp.dtype(w1.dtype).itemsize

    # ---- Tile size over M --------------------------------------------------
    tm = max(8, _round_up(tm, 8))
    if M > 8:
        # Guarantee G >= 2 so the "parallel" axis splits across both v7x TCs;
        # MXU-align (multiple of 256) when the half-split is large enough.
        half = pl.cdiv(M, 2)
        half = _round_up(half, 256) if half >= 256 else _round_up(half, 8)
        TM = min(tm, half)
    else:
        TM = _round_up(M, 8)

    # VMEM budget (fits v7x's 64 MiB with headroom): x buffers + f32
    # intermediates per row, plus single-buffered resident weights.
    nbuf_x = 3 if D <= 256 else 2
    weight_vmem = 2 * D * D * w_bytes + 3 * D * 4
    per_row = nbuf_x * D * x_bytes + 2 * D * 4 + 2 * 4
    budget = (44 << 20) - weight_vmem
    if budget > 0:
        TM = min(TM, max(8, (budget // per_row) // 8 * 8))
    else:
        TM = min(TM, 256)          # huge-D fallback; weights dominate VMEM

    G = pl.cdiv(M, TM)             # last block may read OOB rows (discarded)
    x_mode = pl.Buffered(nbuf_x) if (nbuf_x > 2 and G >= nbuf_x) else None

    # Constant-index blocks: DMA'd once, single-buffered (no VMEM waste).
    def const2d(shape):
        return pl.BlockSpec(shape, lambda i: (0, 0), pipeline_mode=pl.Buffered(1))

    smem = pl.BlockSpec(memory_space=pltpu.MemorySpace.SMEM)

    m_eff = G * TM
    cost = pl.CostEstimate(
        flops=int(4 * m_eff * D * D + 5 * m_eff * D),
        transcendentals=0,
        bytes_accessed=int(M * D * x_bytes + 2 * D * D * w_bytes
                           + 3 * D * 4 + 4 + m_eff * 4),
    )

    needed = weight_vmem + TM * per_row + (6 << 20)
    vmem_limit = int(min(max(needed, 32 << 20), 56 << 20))

    out3d = pl.pallas_call(
        tail_kernel,
        out_shape=jax.ShapeDtypeStruct((G, 1, TM), jnp.float32),
        grid=(G,),
        in_specs=[
            pl.BlockSpec((TM, D), lambda i: (i, 0), pipeline_mode=x_mode),  # x tile
            const2d((D, D)),                                                # w1
            const2d((1, D)),                                                # b1
            const2d((D, D)),                                                # w2
            const2d((1, D)),                                                # b2
            const2d((1, D)),                                                # w3 row
            smem,                                                           # alpha1
            smem,                                                           # alpha2
            smem,                                                           # b3
        ],
        out_specs=pl.BlockSpec((1, 1, TM), lambda i: (i, 0, 0)),
        compiler_params=pltpu.CompilerParams(
            dimension_semantics=("parallel",),
            vmem_limit_bytes=vmem_limit,
        ),
        cost_estimate=cost,
    )(x2d, w1, b1, w2, b2, w3, a1, a2, b3)

    return out3d.reshape(m_eff)[:M].reshape(B, S)


def init_params(key, emb_dim):
    """Deterministic synthetic parameters (shapes match the PyTorch module)."""
    k1, k2, k3, k4, k5, k6 = jax.random.split(key, 6)
    scale = 1.0 / jnp.sqrt(emb_dim)
    # Linear weights stored transposed (in_features, out_features): y = x@W + b.
    w1 = jax.random.uniform(k1, (emb_dim, emb_dim), jnp.float32, -scale, scale)
    b1 = jax.random.uniform(k2, (1, emb_dim), jnp.float32, -scale, scale)
    w2 = jax.random.uniform(k3, (emb_dim, emb_dim), jnp.float32, -scale, scale)
    b2 = jax.random.uniform(k4, (1, emb_dim), jnp.float32, -scale, scale)
    # Final Linear(D, 1): weight kept as a (1, D) row, bias as a (1,) scalar.
    w3 = jax.random.uniform(k5, (1, emb_dim), jnp.float32, -scale, scale)
    b3 = jax.random.uniform(k6, (1,), jnp.float32, -scale, scale)
    # PReLU default init in torch: single shared alpha = 0.25.
    a1 = jnp.full((1,), 0.25, jnp.float32)
    a2 = jnp.full((1,), 0.25, jnp.float32)
    return (w1, b1, a1, w2, b2, a2, w3, b3)


def reference(x, params, matmul_dtype=None):
    """Pure-JAX reference of the PyTorch forward (optionally bf16 matmul operands)."""
    (w1, b1, a1, w2, b2, a2, w3, b3) = params

    def lin(h, w, b):
        if matmul_dtype is not None:
            return jnp.dot(h.astype(matmul_dtype), w.astype(matmul_dtype),
                           preferred_element_type=jnp.float32) + b
        return h @ w + b

    B, S, D = x.shape
    h = x.reshape(B * S, D).astype(jnp.float32)
    h = lin(h, w1, b1)
    h = jnp.where(h > 0, h, a1[0] * h)
    h = lin(h, w2, b2)
    h = jnp.where(h > 0, h, a2[0] * h)
    out = jnp.sum(h * w3, axis=-1) + b3[0]
    return out.reshape(B, S)


if __name__ == "__main__":
    key = jax.random.PRNGKey(0)

    # Small shape matching the module (batch=2, seq=8, emb_dim=32).
    B, S, EMB = 2, 8, 32
    kx, kp, kx2, kp2 = jax.random.split(key, 4)
    x = jax.random.normal(kx, (B, S, EMB), jnp.float32)
    params = init_params(kp, EMB)

    out = jax.block_until_ready(bad_transformer_block_tail(x, params))
    assert out.shape == (B, S), out.shape
    # Exact check against a bf16-matched reference, loose check against f32.
    ref_m = reference(x, params, matmul_dtype=jnp.bfloat16)
    ref_f = reference(x, params)
    assert jnp.allclose(out, ref_m, atol=1e-3, rtol=1e-3), "mismatch (bf16 ref)"
    assert jnp.allclose(out, ref_f, atol=1e-1, rtol=1e-1), "mismatch (f32 ref)"

    # Larger shape exercising the unpadded edge block (M=800 not a multiple of
    # TM), grid of 2, and the MXU-aligned tile path.
    B2, S2, EMB2 = 4, 200, 128
    x2 = jax.random.normal(kx2, (B2, S2, EMB2), jnp.float32)
    params2 = init_params(kp2, EMB2)

    out2 = jax.block_until_ready(bad_transformer_block_tail(x2, params2))
    ref2_m = reference(x2, params2, matmul_dtype=jnp.bfloat16)
    assert out2.shape == (B2, S2), out2.shape
    assert jnp.allclose(out2, ref2_m, atol=1e-3, rtol=1e-3), "mismatch (tiled bf16)"

    # Exact-precision path still available and exact vs the f32 reference.
    out2_f32 = jax.block_until_ready(
        bad_transformer_block_tail(x2, params2, matmul_dtype=None))
    ref2_f = reference(x2, params2)
    assert jnp.allclose(out2_f32, ref2_f, atol=1e-4, rtol=1e-4), "mismatch (f32 path)"

    print("KERNEL_OK")
</pallas_src>

<mosaic_0001>
module attributes {stable_mosaic.version = 11 : i64} {
  func.func @tail_kernel(%arg0: i32, %arg1: memref<8x32xf32, #tpu.memory_space<vmem>>, %arg2: memref<32x32xbf16, #tpu.memory_space<vmem>>, %arg3: memref<1x32xf32, #tpu.memory_space<vmem>>, %arg4: memref<32x32xbf16, #tpu.memory_space<vmem>>, %arg5: memref<1x32xf32, #tpu.memory_space<vmem>>, %arg6: memref<1x32xf32, #tpu.memory_space<vmem>>, %arg7: memref<1xf32, #tpu.memory_space<smem>>, %arg8: memref<1xf32, #tpu.memory_space<smem>>, %arg9: memref<1xf32, #tpu.memory_space<smem>>, %arg10: memref<1x1x8xf32, #tpu.memory_space<vmem>>) attributes {dimension_semantics = [#tpu.dimension_semantics<parallel>], iteration_bounds = array<i64: 2>, scalar_prefetch = 0 : i64, scratch_operands = 0 : i64, tpu.core_type = #tpu.core_type<tc>, window_params = [{transform_indices = @transform_0, window_bounds = array<i64: 8, 32>}, {pipeline_mode = #tpu.pipeline_mode<synchronous>, transform_indices = @transform_1, window_bounds = array<i64: 32, 32>}, {pipeline_mode = #tpu.pipeline_mode<synchronous>, transform_indices = @transform_2, window_bounds = array<i64: 1, 32>}, {pipeline_mode = #tpu.pipeline_mode<synchronous>, transform_indices = @transform_3, window_bounds = array<i64: 32, 32>}, {pipeline_mode = #tpu.pipeline_mode<synchronous>, transform_indices = @transform_4, window_bounds = array<i64: 1, 32>}, {pipeline_mode = #tpu.pipeline_mode<synchronous>, transform_indices = @transform_5, window_bounds = array<i64: 1, 32>}, {transform_indices = @transform_6, window_bounds = array<i64: 1>}, {transform_indices = @transform_7, window_bounds = array<i64: 1>}, {transform_indices = @transform_8, window_bounds = array<i64: 1>}, {transform_indices = @transform_9, window_bounds = array<i64: 1, 1, 8>}]} {
    %c0 = arith.constant 0 : index
    %0 = memref.load %arg7[%c0] : memref<1xf32, #tpu.memory_space<smem>>
    %c0_0 = arith.constant 0 : index
    %1 = memref.load %arg8[%c0_0] : memref<1xf32, #tpu.memory_space<smem>>
    %c0_1 = arith.constant 0 : index
    %2 = memref.load %arg9[%c0_1] : memref<1xf32, #tpu.memory_space<smem>>
    %c0_2 = arith.constant 0 : index
    %c0_3 = arith.constant 0 : index
    %3 = vector.load %arg1[%c0_2, %c0_3] : memref<8x32xf32, #tpu.memory_space<vmem>>, vector<8x32xf32>
    %4 = arith.truncf %3 : vector<8x32xf32> to vector<8x32xbf16>
    %c0_4 = arith.constant 0 : index
    %c0_5 = arith.constant 0 : index
    %5 = vector.load %arg2[%c0_4, %c0_5] : memref<32x32xbf16, #tpu.memory_space<vmem>>, vector<32x32xbf16>
    %cst = arith.constant dense<0.000000e+00> : vector<8x32xf32>
    %6 = tpu.matmul %4, %5, %cst {dimension_numbers = #tpu.dot_dimension_numbers<[1], [0], [0], [1], [0, 0, 1, 1], [], []>} : vector<8x32xbf16>, vector<32x32xbf16>, vector<8x32xf32> -> vector<8x32xf32>
    %c0_6 = arith.constant 0 : index
    %c0_7 = arith.constant 0 : index
    %7 = vector.load %arg3[%c0_6, %c0_7] : memref<1x32xf32, #tpu.memory_space<vmem>>, vector<1x32xf32>
    %8 = vector.broadcast %7 : vector<1x32xf32> to vector<8x32xf32>
    %9 = arith.addf %6, %8 : vector<8x32xf32>
    %cst_8 = arith.constant 0.000000e+00 : f32
    %10 = vector.broadcast %cst_8 : f32 to vector<8x32xf32>
    %11 = arith.cmpf ogt, %9, %10 : vector<8x32xf32>
    %12 = vector.broadcast %0 : f32 to vector<8x32xf32>
    %13 = arith.mulf %12, %9 : vector<8x32xf32>
    %14 = arith.select %11, %9, %13 : vector<8x32xi1>, vector<8x32xf32>
    %15 = arith.truncf %14 : vector<8x32xf32> to vector<8x32xbf16>
    %c0_9 = arith.constant 0 : index
    %c0_10 = arith.constant 0 : index
    %16 = vector.load %arg4[%c0_9, %c0_10] : memref<32x32xbf16, #tpu.memory_space<vmem>>, vector<32x32xbf16>
    %cst_11 = arith.constant dense<0.000000e+00> : vector<8x32xf32>
    %17 = tpu.matmul %15, %16, %cst_11 {dimension_numbers = #tpu.dot_dimension_numbers<[1], [0], [0], [1], [0, 0, 1, 1], [], []>} : vector<8x32xbf16>, vector<32x32xbf16>, vector<8x32xf32> -> vector<8x32xf32>
    %c0_12 = arith.constant 0 : index
    %c0_13 = arith.constant 0 : index
    %18 = vector.load %arg5[%c0_12, %c0_13] : memref<1x32xf32, #tpu.memory_space<vmem>>, vector<1x32xf32>
    %19 = vector.broadcast %18 : vector<1x32xf32> to vector<8x32xf32>
    %20 = arith.addf %17, %19 : vector<8x32xf32>
    %cst_14 = arith.constant 0.000000e+00 : f32
    %21 = vector.broadcast %cst_14 : f32 to vector<8x32xf32>
    %22 = arith.cmpf ogt, %20, %21 : vector<8x32xf32>
    %23 = vector.broadcast %1 : f32 to vector<8x32xf32>
    %24 = arith.mulf %23, %20 : vector<8x32xf32>
    %25 = arith.select %22, %20, %24 : vector<8x32xi1>, vector<8x32xf32>
    %c0_15 = arith.constant 0 : index
    %c0_16 = arith.constant 0 : index
    %26 = vector.load %arg6[%c0_15, %c0_16] : memref<1x32xf32, #tpu.memory_space<vmem>>, vector<1x32xf32>
    %27 = vector.broadcast %26 : vector<1x32xf32> to vector<8x32xf32>
    %28 = arith.mulf %25, %27 : vector<8x32xf32>
    %cst_17 = arith.constant dense<0.000000e+00> : vector<8xf32>
    %29 = vector.multi_reduction <add>, %28, %cst_17 [1] : vector<8x32xf32> to vector<8xf32>
    %30 = vector.broadcast %2 : f32 to vector<8xf32>
    %31 = arith.addf %29, %30 : vector<8xf32>
    %32 = vector.shape_cast %31 : vector<8xf32> to vector<1x1x8xf32>
    %c0_18 = arith.constant 0 : index
    %c0_19 = arith.constant 0 : index
    %c0_20 = arith.constant 0 : index
    %33 = vector.load %arg10[%c0_18, %c0_19, %c0_20] : memref<1x1x8xf32, #tpu.memory_space<vmem>>, vector<1x1x8xf32>
    tpu.vector_store %arg10[%c0_18, %c0_19, %c0_20], %32 {strides = array<i32>} : memref<1x1x8xf32, #tpu.memory_space<vmem>>, vector<1x1x8xf32>,
    return
  }
  func.func @transform_0(%arg0: i32) -> (i32, i32) {
    %c0_i32 = arith.constant 0 : i32
    %c0_i32_0 = arith.constant 0 : i32
    return %arg0, %c0_i32 : i32, i32
  }
  func.func @transform_1(%arg0: i32) -> (i32, i32) {
    %c0_i32 = arith.constant 0 : i32
    %c0_i32_0 = arith.constant 0 : i32
    %c0_i32_1 = arith.constant 0 : i32
    return %c0_i32, %c0_i32_0 : i32, i32
  }
  func.func @transform_2(%arg0: i32) -> (i32, i32) {
    %c0_i32 = arith.constant 0 : i32
    %c0_i32_0 = arith.constant 0 : i32
    %c0_i32_1 = arith.constant 0 : i32
    return %c0_i32, %c0_i32_0 : i32, i32
  }
  func.func @transform_3(%arg0: i32) -> (i32, i32) {
    %c0_i32 = arith.constant 0 : i32
    %c0_i32_0 = arith.constant 0 : i32
    %c0_i32_1 = arith.constant 0 : i32
    return %c0_i32, %c0_i32_0 : i32, i32
  }
  func.func @transform_4(%arg0: i32) -> (i32, i32) {
    %c0_i32 = arith.constant 0 : i32
    %c0_i32_0 = arith.constant 0 : i32
    %c0_i32_1 = arith.constant 0 : i32
    return %c0_i32, %c0_i32_0 : i32, i32
  }
  func.func @transform_5(%arg0: i32) -> (i32, i32) {
    %c0_i32 = arith.constant 0 : i32
    %c0_i32_0 = arith.constant 0 : i32
    %c0_i32_1 = arith.constant 0 : i32
    return %c0_i32, %c0_i32_0 : i32, i32
  }
  func.func @transform_6(%arg0: i32) -> i32 {
    %c0_i32 = arith.constant 0 : i32
    %c0_i32_0 = arith.constant 0 : i32
    return %c0_i32 : i32
  }
  func.func @transform_7(%arg0: i32) -> i32 {
    %c0_i32 = arith.constant 0 : i32
    %c0_i32_0 = arith.constant 0 : i32
    return %c0_i32 : i32
  }
  func.func @transform_8(%arg0: i32) -> i32 {
    %c0_i32 = arith.constant 0 : i32
    %c0_i32_0 = arith.constant 0 : i32
    return %c0_i32 : i32
  }
  func.func @transform_9(%arg0: i32) -> (i32, i32, i32) {
    %c0_i32 = arith.constant 0 : i32
    %c0_i32_0 = arith.constant 0 : i32
    %c0_i32_1 = arith.constant 0 : i32
    return %arg0, %c0_i32, %c0_i32_0 : i32, i32, i32
  }
}

</mosaic_0001>

<llo_original>
// kernel: tpu_custom_call.1
$region0: #{tpu_custom_call.1}
  #allocation0 [shape = 'u32[]', space=smem, size = 0x4, offset = 0x4, fixed_abs, tag = 'smem constant byte address 0x4 - core index']
  #allocation1 [shape = 'u32[72,128]{1,0:T(1,128)}', space=vmem, size = 0x9000, scoped, tag = 'internal scratch']
  #allocation2 [shape = 'f32[1]{0:T(128)S(6)}', space=smem, size = 0x200, scoped, tag = 'scoped memory for tpu_custom_call.1']
  #allocation3 [shape = 'f32[1]{0:T(128)S(6)}', space=smem, size = 0x200, scoped, tag = 'scoped memory for tpu_custom_call.1']
  #allocation4 [shape = 'f32[1]{0:T(128)S(6)}', space=smem, size = 0x200, scoped, tag = 'scoped memory for tpu_custom_call.1']
  %s0 = inlined_call_operand.hbm [shape: f32[16,32], index: 0, kind: input, shape index: {}]
  %s1 = inlined_call_operand.hbm [shape: bf16[32,32], index: 1, kind: input, shape index: {}]
  %s2 = inlined_call_operand.vmem [shape: f32[1,32], index: 2, kind: input, shape index: {}]
  %s3 = inlined_call_operand.hbm [shape: bf16[32,32], index: 3, kind: input, shape index: {}]
  %s4 = inlined_call_operand.vmem [shape: f32[1,32], index: 4, kind: input, shape index: {}]
  %s5 = inlined_call_operand.vmem [shape: f32[1,32], index: 5, kind: input, shape index: {}]
  %s6 = inlined_call_operand.<no memory space> [shape: f32[1], index: 6, kind: input, shape index: {}]
  %s7 = inlined_call_operand.<no memory space> [shape: f32[1], index: 7, kind: input, shape index: {}]
  %s8 = inlined_call_operand.<no memory space> [shape: f32[1], index: 8, kind: input, shape index: {}]
  %s9 = inlined_call_operand.hbm [shape: f32[2,1,8], index: 9, kind: output, shape index: {}]
  %s10 = sld [smem:[#allocation0]]
  $region81: #{tpu_custom_call.1} parent=0
    _
  %s12 = ssub.s32 1, %s10
  %s13 = scalar_select 0, %s12, %s10
  %14 = sst [smem:[#allocation2]] %s6
  %15 = sst [smem:[#allocation3]] %s7
  %16 = sst [smem:[#allocation4]] %s8
  $region1: #{tpu_custom_call.1} parent=0
    #allocation5 [shape = 'u8[8192]{0}', space=vmem, size = 0x2000, scoped, tag = 'input window, operand 0']
    #allocation6 [shape = 's32[2]{0}', space=sflag, size = 0x8, scoped, tag = 'scoped memory for tpu_custom_call.1']
    #allocation7 [shape = 's32[2]{0}', space=sflag, size = 0x8, scoped, tag = 'scoped memory for tpu_custom_call.1']
    #allocation8 [shape = 'u8[8192]{0}', space=vmem, size = 0x2000, scoped, tag = 'input window, operand 1, single buffered']
    #allocation9 [shape = 's32[1]{0}', space=sflag, size = 0x4, scoped, tag = 'scoped memory for tpu_custom_call.1']
    #allocation10 [shape = 'u8[8192]{0}', space=vmem, size = 0x2000, scoped, tag = 'input window, operand 3, single buffered']
    #allocation11 [shape = 'u8[1024]{0}', space=vmem, size = 0x400, scoped, tag = 'output window, operand 0']
    %17 = vsyncpa [#allocation6], 0
    %s18 = scalar_lea.sflag [#allocation6], 1
    %19 = vsyncpa %s18, 0
    %20 = vsyncpa [#allocation9], 0
    %21 = vsyncpa [#allocation7], 0
    %s22 = scalar_lea.sflag [#allocation7], 1
    %23 = vsyncpa %s22, 0
    loop: start=0, step=1, limit=4
    $region2: #{tpu_custom_call.1} parent=1 // loop_pre_header
      _
    $region3: #{tpu_custom_call.1} parent=1 // loop_header
      %s25 = sphi 0, %s29
      %p26 = scmp.ge.s32.totalorder %s25, 4
      %s35 = sphi 0, %s37
      %s38 = sphi 0, %s35
      %s39 = sphi 0, %s38
      %s55 = sphi 0, %s39
      %s59 = sphi 0, %s59
      %s61 = sphi 0, %s59
      %s62 = sphi 0, %s61
      %s76 = sphi 0, %s62
      %s80 = sphi 0, %s80
      %s82 = sphi 0, %s80
      %s83 = sphi 0, %s82
      %s97 = sphi 0, %s83
      %s101 = sphi 0, %s101
      %s103 = sphi 0, %s101
      %s104 = sphi 0, %s103
      %s118 = sphi 0, %s104
      %s122 = sphi 0, %s122
      %s124 = sphi 0, %s122
      %s125 = sphi 0, %s124
      %s139 = sphi 0, %s125
      %s143 = sphi 0, %s143
      %s145 = sphi 0, %s143
      %s146 = sphi 0, %s145
      %s160 = sphi 0, %s146
      %s164 = sphi 0, %s164
      %s166 = sphi 0, %s164
      %s167 = sphi 0, %s166
      %s181 = sphi 0, %s167
      %s185 = sphi 0, %s185
      %s187 = sphi 0, %s185
      %s188 = sphi 0, %s187
      %s202 = sphi 0, %s188
      %s206 = sphi 0, %s206
      %s208 = sphi 0, %s206
      %s209 = sphi 0, %s208
      %s223 = sphi 0, %s209
      %s229 = sphi 0, %s231
      %s232 = sphi 0, %s229
      %s233 = sphi 0, %s232
      %s249 = sphi 0, %s233
    $region4: #{tpu_custom_call.1} parent=1 // loop_header_branch
      %28 = sbr.rel (%p26) target = $region8
    $region5: #{tpu_custom_call.1} parent=1 // loop_body
      %s30 = ssub.s32 %s25, 1
      %s31 = ssub.s32 %s25, 2
      %s32 = sadd.s32 %s25, 1
      %s33 = ssub.s32 %s25, %s32
      %p34 = scmp.eq.s32.totalorder %s33, 0
      %s36 = sadd.s32 %s35, 1
      %s37 = scalar_select %p34, %s35, %s36
      %p40 = pneg %p34
      %p41 = scmp.eq.s32.totalorder %s25, 1
      %p42 = por %p40, %p41
      %p43 = scmp.ne.s32.totalorder %s35, %s38
      %p44 = scmp.eq.s32.totalorder %s25, 0
      %p45 = por %p43, %p44
      %p46 = scmp.ne.s32.totalorder %s35, %s38
      %p47 = scmp.eq.s32.totalorder %s30, 1
      %p48 = por %p46, %p47
      %p49 = scmp.ne.s32.totalorder %s38, %s39
      %p50 = scmp.eq.s32.totalorder %s30, 0
      %p51 = por %p49, %p50
      %p52 = scmp.ne.s32.totalorder %s38, %s39
      %p53 = scmp.eq.s32.totalorder %s31, 1
      %p54 = por %p52, %p53
      %p56 = scmp.ne.s32.totalorder %s39, %s55
      %p57 = scmp.eq.s32.totalorder %s31, 0
      %p58 = por %p56, %p57
      %s60 = sadd.s32 %s59, 1
      %p63 = scmp.eq.s32.totalorder %s25, 1
      %p64 = scmp.ne.s32.totalorder %s59, %s61
      %p65 = scmp.eq.s32.totalorder %s25, 0
      %p66 = por %p64, %p65
      %p67 = scmp.ne.s32.totalorder %s59, %s61
      %p68 = scmp.eq.s32.totalorder %s30, 1
      %p69 = por %p67, %p68
      %p70 = scmp.ne.s32.totalorder %s61, %s62
      %p71 = scmp.eq.s32.totalorder %s30, 0
      %p72 = por %p70, %p71
      %p73 = scmp.ne.s32.totalorder %s61, %s62
      %p74 = scmp.eq.s32.totalorder %s31, 1
      %p75 = por %p73, %p74
      %p77 = scmp.ne.s32.totalorder %s62, %s76
      %p78 = scmp.eq.s32.totalorder %s31, 0
      %p79 = por %p77, %p78
      %s81 = sadd.s32 %s80, 1
      %p84 = scmp.eq.s32.totalorder %s25, 1
      %p85 = scmp.ne.s32.totalorder %s80, %s82
      %p86 = scmp.eq.s32.totalorder %s25, 0
      %p87 = por %p85, %p86
      %p88 = scmp.ne.s32.totalorder %s80, %s82
      %p89 = scmp.eq.s32.totalorder %s30, 1
      %p90 = por %p88, %p89
      %p91 = scmp.ne.s32.totalorder %s82, %s83
      %p92 = scmp.eq.s32.totalorder %s30, 0
      %p93 = por %p91, %p92
      %p94 = scmp.ne.s32.totalorder %s82, %s83
      %p95 = scmp.eq.s32.totalorder %s31, 1
      %p96 = por %p94, %p95
      %p98 = scmp.ne.s32.totalorder %s83, %s97
      %p99 = scmp.eq.s32.totalorder %s31, 0
      %p100 = por %p98, %p99
      %s102 = sadd.s32 %s101, 1
      %p105 = scmp.eq.s32.totalorder %s25, 1
      %p106 = scmp.ne.s32.totalorder %s101, %s103
      %p107 = scmp.eq.s32.totalorder %s25, 0
      %p108 = por %p106, %p107
      %p109 = scmp.ne.s32.totalorder %s101, %s103
      %p110 = scmp.eq.s32.totalorder %s30, 1
      %p111 = por %p109, %p110
      %p112 = scmp.ne.s32.totalorder %s103, %s104
      %p113 = scmp.eq.s32.totalorder %s30, 0
      %p114 = por %p112, %p113
      %p115 = scmp.ne.s32.totalorder %s103, %s104
      %p116 = scmp.eq.s32.totalorder %s31, 1
      %p117 = por %p115, %p116
      %p119 = scmp.ne.s32.totalorder %s104, %s118
      %p120 = scmp.eq.s32.totalorder %s31, 0
      %p121 = por %p119, %p120
      %s123 = sadd.s32 %s122, 1
      %p126 = scmp.eq.s32.totalorder %s25, 1
      %p127 = scmp.ne.s32.totalorder %s122, %s124
      %p128 = scmp.eq.s32.totalorder %s25, 0
      %p129 = por %p127, %p128
      %p130 = scmp.ne.s32.totalorder %s122, %s124
      %p131 = scmp.eq.s32.totalorder %s30, 1
      %p132 = por %p130, %p131
      %p133 = scmp.ne.s32.totalorder %s124, %s125
      %p134 = scmp.eq.s32.totalorder %s30, 0
      %p135 = por %p133, %p134
      %p136 = scmp.ne.s32.totalorder %s124, %s125
      %p137 = scmp.eq.s32.totalorder %s31, 1
      %p138 = por %p136, %p137
      %p140 = scmp.ne.s32.totalorder %s125, %s139
      %p141 = scmp.eq.s32.totalorder %s31, 0
      %p142 = por %p140, %p141
      %s144 = sadd.s32 %s143, 1
      %p147 = scmp.eq.s32.totalorder %s25, 1
      %p148 = scmp.ne.s32.totalorder %s143, %s145
      %p149 = scmp.eq.s32.totalorder %s25, 0
      %p150 = por %p148, %p149
      %p151 = scmp.ne.s32.totalorder %s143, %s145
      %p152 = scmp.eq.s32.totalorder %s30, 1
      %p153 = por %p151, %p152
      %p154 = scmp.ne.s32.totalorder %s145, %s146
      %p155 = scmp.eq.s32.totalorder %s30, 0
      %p156 = por %p154, %p155
      %p157 = scmp.ne.s32.totalorder %s145, %s146
      %p158 = scmp.eq.s32.totalorder %s31, 1
      %p159 = por %p157, %p158
      %p161 = scmp.ne.s32.totalorder %s146, %s160
      %p162 = scmp.eq.s32.totalorder %s31, 0
      %p163 = por %p161, %p162
      %s165 = sadd.s32 %s164, 1
      %p168 = scmp.eq.s32.totalorder %s25, 1
      %p169 = scmp.ne.s32.totalorder %s164, %s166
      %p170 = scmp.eq.s32.totalorder %s25, 0
      %p171 = por %p169, %p170
      %p172 = scmp.ne.s32.totalorder %s164, %s166
      %p173 = scmp.eq.s32.totalorder %s30, 1
      %p174 = por %p172, %p173
      %p175 = scmp.ne.s32.totalorder %s166, %s167
      %p176 = scmp.eq.s32.totalorder %s30, 0
      %p177 = por %p175, %p176
      %p178 = scmp.ne.s32.totalorder %s166, %s167
      %p179 = scmp.eq.s32.totalorder %s31, 1
      %p180 = por %p178, %p179
      %p182 = scmp.ne.s32.totalorder %s167, %s181
      %p183 = scmp.eq.s32.totalorder %s31, 0
      %p184 = por %p182, %p183
      %s186 = sadd.s32 %s185, 1
      %p189 = scmp.eq.s32.totalorder %s25, 1
      %p190 = scmp.ne.s32.totalorder %s185, %s187
      %p191 = scmp.eq.s32.totalorder %s25, 0
      %p192 = por %p190, %p191
      %p193 = scmp.ne.s32.totalorder %s185, %s187
      %p194 = scmp.eq.s32.totalorder %s30, 1
      %p195 = por %p193, %p194
      %p196 = scmp.ne.s32.totalorder %s187, %s188
      %p197 = scmp.eq.s32.totalorder %s30, 0
      %p198 = por %p196, %p197
      %p199 = scmp.ne.s32.totalorder %s187, %s188
      %p200 = scmp.eq.s32.totalorder %s31, 1
      %p201 = por %p199, %p200
      %p203 = scmp.ne.s32.totalorder %s188, %s202
      %p204 = scmp.eq.s32.totalorder %s31, 0
      %p205 = por %p203, %p204
      %s207 = sadd.s32 %s206, 1
      %p210 = scmp.eq.s32.totalorder %s25, 1
      %p211 = scmp.ne.s32.totalorder %s206, %s208
      %p212 = scmp.eq.s32.totalorder %s25, 0
      %p213 = por %p211, %p212
      %p214 = scmp.ne.s32.totalorder %s206, %s208
      %p215 = scmp.eq.s32.totalorder %s30, 1
      %p216 = por %p214, %p215
      %p217 = scmp.ne.s32.totalorder %s208, %s209
      %p218 = scmp.eq.s32.totalorder %s30, 0
      %p219 = por %p217, %p218
      %p220 = scmp.ne.s32.totalorder %s208, %s209
      %p221 = scmp.eq.s32.totalorder %s31, 1
      %p222 = por %p220, %p221
      %p224 = scmp.ne.s32.totalorder %s209, %s223
      %p225 = scmp.eq.s32.totalorder %s31, 0
      %p226 = por %p224, %p225
      %s227 = ssub.s32 %s25, %s32
      %p228 = scmp.eq.s32.totalorder %s227, 0
      %s230 = sadd.s32 %s229, 1
      %s231 = scalar_select %p228, %s229, %s230
      %p234 = pneg %p228
      %p235 = scmp.eq.s32.totalorder %s25, 1
      %p236 = por %p234, %p235
      %p237 = scmp.ne.s32.totalorder %s229, %s232
      %p238 = scmp.eq.s32.totalorder %s25, 0
      %p239 = por %p237, %p238
      %p240 = scmp.ne.s32.totalorder %s229, %s232
      %p241 = scmp.eq.s32.totalorder %s30, 1
      %p242 = por %p240, %p241
      %p243 = scmp.ne.s32.totalorder %s232, %s233
      %p244 = scmp.eq.s32.totalorder %s30, 0
      %p245 = por %p243, %p244
      %p246 = scmp.ne.s32.totalorder %s232, %s233
      %p247 = scmp.eq.s32.totalorder %s31, 1
      %p248 = por %p246, %p247
      %p250 = scmp.ne.s32.totalorder %s233, %s249
      %p251 = scmp.eq.s32.totalorder %s31, 0
      %p252 = por %p250, %p251
      %p253 = scmp.le.s32.totalorder 1, %s25
      %p254 = scmp.lt.s32.totalorder %s25, 3
      %p255 = pnand %p253, %p254
      %p256 = pneg %p255
      // Predicated region
      $region9: #{tpu_custom_call.1} parent=5 // pred_check
        _
      $region10: #{tpu_custom_call.1} parent=5 // pred_check_branch
        %258 = sbr.rel (%p255) target = $region12
      $region11: #{tpu_custom_call.1} parent=5 // pred_region
        %s259 = ssub.s32 %s25, 1
        // Predicated region
        $region13: #{tpu_custom_call.1} parent=11 // pred_check
          %p260 = pneg %p72
        $region14: #{tpu_custom_call.1} parent=11 // pred_check_branch
          %262 = sbr.rel (%p260) target = $region16
        $region15: #{tpu_custom_call.1} parent=11 // pred_region
          %264 = vsyncadd [#allocation9], 0
          %s265 = sshll.u32 %s1, 4
          %s266 = int_to_ptr.hbm [resolvable:$true] %s265
          %s267 = sshll.u32 [#allocation8], 4
          %s268 = int_to_ptr.vmem [resolvable:$true] %s267
          %273 = dma.hbm_to_vmem [thread:$0]  %s266, 256, %s268, [#allocation9], 64, 64, 4
        $region16: #{tpu_custom_call.1} parent=11 // pred_fallthru
          _
        // Predicated region
        $region17: #{tpu_custom_call.1} parent=11 // pred_check
          %p274 = pneg %p93
        $region18: #{tpu_custom_call.1} parent=11 // pred_check_branch
          %276 = sbr.rel (%p274) target = $region20
        $region19: #{tpu_custom_call.1} parent=11 // pred_region
          _
        $region20: #{tpu_custom_call.1} parent=11 // pred_fallthru
          _
        // Predicated region
        $region21: #{tpu_custom_call.1} parent=11 // pred_check
          %p277 = pneg %p114
        $region22: #{tpu_custom_call.1} parent=11 // pred_check_branch
          %279 = sbr.rel (%p277) target = $region24
        $region23: #{tpu_custom_call.1} parent=11 // pred_region
          %281 = vsyncadd [#allocation9], 0
          %s282 = sshll.u32 %s3, 4
          %s283 = int_to_ptr.hbm [resolvable:$true] %s282
          %s284 = sshll.u32 [#allocation10], 4
          %s285 = int_to_ptr.vmem [resolvable:$true] %s284
          %290 = dma.hbm_to_vmem [thread:$0]  %s283, 256, %s285, [#allocation9], 64, 64, 4
        $region24: #{tpu_custom_call.1} parent=11 // pred_fallthru
          _
        // Predicated region
        $region25: #{tpu_custom_call.1} parent=11 // pred_check
          %p291 = pneg %p135
        $region26: #{tpu_custom_call.1} parent=11 // pred_check_branch
          %293 = sbr.rel (%p291) target = $region28
        $region27: #{tpu_custom_call.1} parent=11 // pred_region
          _
        $region28: #{tpu_custom_call.1} parent=11 // pred_fallthru
          _
        // Predicated region
        $region29: #{tpu_custom_call.1} parent=11 // pred_check
          %p294 = pneg %p156
        $region30: #{tpu_custom_call.1} parent=11 // pred_check_branch
          %296 = sbr.rel (%p294) target = $region32
        $region31: #{tpu_custom_call.1} parent=11 // pred_region
          _
        $region32: #{tpu_custom_call.1} parent=11 // pred_fallthru
          _
        // Predicated region
        $region33: #{tpu_custom_call.1} parent=11 // pred_check
          %p297 = pneg %p177
        $region34: #{tpu_custom_call.1} parent=11 // pred_check_branch
          %299 = sbr.rel (%p297) target = $region36
        $region35: #{tpu_custom_call.1} parent=11 // pred_region
          _
        $region36: #{tpu_custom_call.1} parent=11 // pred_fallthru
          _
        // Predicated region
        $region37: #{tpu_custom_call.1} parent=11 // pred_check
          %p300 = pneg %p198
        $region38: #{tpu_custom_call.1} parent=11 // pred_check_branch
          %302 = sbr.rel (%p300) target = $region40
        $region39: #{tpu_custom_call.1} parent=11 // pred_region
          _
        $region40: #{tpu_custom_call.1} parent=11 // pred_fallthru
          _
        // Predicated region
        $region41: #{tpu_custom_call.1} parent=11 // pred_check
          %p303 = pneg %p219
        $region42: #{tpu_custom_call.1} parent=11 // pred_check_branch
          %305 = sbr.rel (%p303) target = $region44
        $region43: #{tpu_custom_call.1} parent=11 // pred_region
          _
        $region44: #{tpu_custom_call.1} parent=11 // pred_fallthru
          _
      $region12: #{tpu_custom_call.1} parent=5 // pred_fallthru
        _
      %p306 = scmp.lt.s32.totalorder %s25, 2
      // Predicated region
      $region45: #{tpu_custom_call.1} parent=5 // pred_check
        %p307 = pneg %p306
      $region46: #{tpu_custom_call.1} parent=5 // pred_check_branch
        %309 = sbr.rel (%p307) target = $region48
      $region47: #{tpu_custom_call.1} parent=5 // pred_region
        // Predicated region
        $region49: #{tpu_custom_call.1} parent=47 // pred_check
          %p310 = pneg %p45
        $region50: #{tpu_custom_call.1} parent=47 // pred_check_branch
          %312 = sbr.rel (%p310) target = $region52
        $region51: #{tpu_custom_call.1} parent=47 // pred_region
          %s313 = sand.u32 %s35, 1
          %s314 = scalar_lea.sflag [#allocation6], %s313
          %s315 = sand.u32 %s35, 1
          %s316 = smul.addr %s315, 8
          %s317 = scalar_lea.vmem [#allocation5], %s316
          %319 = vsyncadd %s314, 0
          %s320 = smul.addr %s25, 8
          %s321 = scalar_lea.hbm %s0, %s320
          %s323 = sshll.u32 %s321, 4
          %s324 = int_to_ptr.hbm [resolvable:$true] %s323
          %s325 = sshll.u32 %s317, 4
          %s326 = int_to_ptr.vmem [resolvable:$true] %s325
          %328 = dma.hbm_to_vmem [thread:$0]  %s324, 128, %s326, %s314
        $region52: #{tpu_custom_call.1} parent=47 // pred_fallthru
          _
      $region48: #{tpu_custom_call.1} parent=5 // pred_fallthru
        _
      %p329 = scmp.le.s32.totalorder 1, %s25
      %p330 = scmp.lt.s32.totalorder %s25, 3
      %p331 = pnand %p329, %p330
      %p332 = pneg %p331
      // Predicated region
      $region53: #{tpu_custom_call.1} parent=5 // pred_check
        _
      $region54: #{tpu_custom_call.1} parent=5 // pred_check_branch
        %334 = sbr.rel (%p331) target = $region56
      $region55: #{tpu_custom_call.1} parent=5 // pred_region
        %s335 = ssub.s32 %s25, 1
        %s336 = sand.u32 %s38, 1
        %s337 = scalar_lea.sflag [#allocation6], %s336
        %s338 = sand.u32 %s38, 1
        %s339 = smul.addr %s338, 8
        %s340 = scalar_lea.vmem [#allocation5], %s339
        // Predicated region
        $region57: #{tpu_custom_call.1} parent=55 // pred_check
          %p341 = pneg %p51
        $region58: #{tpu_custom_call.1} parent=55 // pred_check_branch
          %343 = sbr.rel (%p341) target = $region60
        $region59: #{tpu_custom_call.1} parent=55 // pred_region
          %345 = dma.done %s337, 128
        $region60: #{tpu_custom_call.1} parent=55 // pred_fallthru
          _
        // Predicated region
        $region61: #{tpu_custom_call.1} parent=55 // pred_check
          %p346 = pneg %p72
        $region62: #{tpu_custom_call.1} parent=55 // pred_check_branch
          %348 = sbr.rel (%p346) target = $region64
        $region63: #{tpu_custom_call.1} parent=55 // pred_region
          %350 = dma.done [#allocation9], 256
        $region64: #{tpu_custom_call.1} parent=55 // pred_fallthru
          _
        // Predicated region
        $region65: #{tpu_custom_call.1} parent=55 // pred_check
          %p351 = pneg %p114
        $region66: #{tpu_custom_call.1} parent=55 // pred_check_branch
          %353 = sbr.rel (%p351) target = $region68
        $region67: #{tpu_custom_call.1} parent=55 // pred_region
          %355 = dma.done [#allocation9], 256
        $region68: #{tpu_custom_call.1} parent=55 // pred_fallthru
          _
        %s356 = sand.u32 %s38, 1
        %s357 = scalar_lea.sflag [#allocation6], %s356
        %s358 = sand.u32 %s38, 1
        %s359 = smul.addr %s358, 8
        %s360 = scalar_lea.vmem [#allocation5], %s359
        %p361 = pneg %p51
        %p362 = pneg %p48
        %p363 = pneg %p72
        %p364 = pneg %p69
        %p365 = pneg %p93
        %p366 = pneg %p90
        %p367 = pneg %p114
        %p368 = pneg %p111
        %p369 = pneg %p135
        %p370 = pneg %p132
        %p371 = pneg %p156
        %p372 = pneg %p153
        %p373 = pneg %p177
        %p374 = pneg %p174
        %p375 = pneg %p198
        %p376 = pneg %p195
        %p377 = pneg %p219
        %p378 = pneg %p216
        %p379 = pneg %p245
        %p380 = pneg %p242
        %s381 = sand.u32 %s232, 1
        %s382 = scalar_lea.sflag [#allocation7], %s381
        %s383 = sand.u32 %s232, 1
        %s384 = scalar_lea.vmem [#allocation11], %s383
        %s386 = sld [smem:[#allocation2]]
        %s387 = sld [smem:[#allocation3]]
        %s388 = sld [smem:[#allocation4]]
        %v389 = vld [vmem:[%s340] sm:$0xff]
        %v390 = vpack.c.bf16 %v389, %v389
        %v391 = vld [vmem:[#allocation8] sm:$0xf]
        %v392 = vld [vmem:[#allocation8 + $0x4] sm:$0xf]
        %v393 = vld [vmem:[#allocation8 + $0x8] sm:$0xf]
        %v394 = vld [vmem:[#allocation8 + $0xc] sm:$0xf]
        %v395 = vld [vmem:[%s2] sm:$0x1]
        %v397 = vperm.slane %v395, 0
        %v403 = vunpack.c.l.b16 %v391
        %v404 = vunpack.c.l.b16 %v392
        %v405 = vunpack.c.l.b16 %v393
        %v406 = vunpack.c.l.b16 %v394
        %v407 = vpack.c.b16 %v404, %v403
        %v408 = vpack.c.b16 %v406, %v405
        %vm411 = vcmask 261120
        %v413 = vsel %vm411, %v390, 0
        %415 = vmatpush.bf16.msra.mxu0 0
        %416 = vmatpush.bf16.msra.mxu0 0
        %417 = vmatpush.bf16.msra.mxu0 0
        %418 = vmatpush.bf16.msra.mxu0 0
        %419 = vmatpush.bf16.msra.mxu0 0
        %420 = vmatpush.bf16.msra.mxu0 0
        %421 = vmatpush.bf16.msra.mxu0 %v408
        %422 = vmatpush.bf16.msra.mxu0 %v407
        %423 = vmatmul.bf16.gmra.mxu0 %v413
        %v424 = vpop.f32.mrf.mxu0
        %v425 = vadd.f32 %v397, %v424
        %v426 = vpop.f32.mrf.mxu0
        %427 = vdwg.mxu0
        %vm428 = vcmp.gt.f32.partialorder %v425, 0.0
        %v429 = vstv %s386
        %v430 = vmul.f32 %v429, %v425
        %v431 = vsel %vm428, %v425, %v430
        %v432 = vpack.c.bf16 %v431, %v431
        %v433 = vld [vmem:[#allocation10] sm:$0xf]
        %v434 = vld [vmem:[#allocation10 + $0x4] sm:$0xf]
        %v435 = vld [vmem:[#allocation10 + $0x8] sm:$0xf]
        %v436 = vld [vmem:[#allocation10 + $0xc] sm:$0xf]
        %v437 = vld [vmem:[%s4] sm:$0x1]
        %v439 = vperm.slane %v437, 0
        %v445 = vunpack.c.l.b16 %v433
        %v446 = vunpack.c.l.b16 %v434
        %v447 = vunpack.c.l.b16 %v435
        %v448 = vunpack.c.l.b16 %v436
        %v449 = vpack.c.b16 %v446, %v445
        %v450 = vpack.c.b16 %v448, %v447
        %v454 = vsel %vm411, %v432, 0
        %456 = vmatpush.bf16.msra.mxu0 0
        %457 = vmatpush.bf16.msra.mxu0 0
        %458 = vmatpush.bf16.msra.mxu0 0
        %459 = vmatpush.bf16.msra.mxu0 0
        %460 = vmatpush.bf16.msra.mxu0 0
        %461 = vmatpush.bf16.msra.mxu0 0
        %462 = vmatpush.bf16.msra.mxu0 %v450
        %463 = vmatpush.bf16.msra.mxu0 %v449
        %464 = vmatmul.bf16.gmra.mxu0 %v454
        %v465 = vpop.f32.mrf.mxu0
        %v466 = vadd.f32 %v439, %v465
        %v467 = vpop.f32.mrf.mxu0
        %468 = vdwg.mxu0
        %vm469 = vcmp.gt.f32.partialorder %v466, 0.0
        %v470 = vstv %s387
        %v471 = vmul.f32 %v470, %v466
        %v472 = vsel %vm469, %v466, %v471
        %v473 = vld [vmem:[%s5] sm:$0x1]
        %v475 = vperm.slane %v473, 0
        %v477 = vmul.f32 %v472, %v475
        %v478 = vsel %vm411, %v477, 0.0
        %479 = vadd.xlane.f32.xlu0 %v478
        %v480 = vpop.xlane.xlu0 %479
        %v481 = vstv %s388
        %v482 = vadd.f32 %v480, %v481
        %v484 = vlaneseq
        %v485 = vand.u32 %v484, 127
        %v486 = vperm.slane %v482, %v485
        %vm488 = vcmask 57344
        %489 = vst.msk [vmem:[%s384] sm:$0x1] %vm488, %v486
        %s490 = sand.u32 %s232, 1
        %s491 = scalar_lea.sflag [#allocation7], %s490
        %s492 = sand.u32 %s232, 1
        %s493 = scalar_lea.vmem [#allocation11], %s492
        // Predicated region
        $region69: #{tpu_custom_call.1} parent=55 // pred_check
          %p494 = pneg %p242
        $region70: #{tpu_custom_call.1} parent=55 // pred_check_branch
          %496 = sbr.rel (%p494) target = $region72
        $region71: #{tpu_custom_call.1} parent=55 // pred_region
          %498 = vsyncadd %s491, 0
          %s499 = scalar_lea.hbm %s9, %s30
          %s501 = sshll.u32 %s493, 4
          %s502 = int_to_ptr.vmem [resolvable:$true] %s501
          %s503 = sshll.u32 %s499, 4
          %s504 = int_to_ptr.hbm [resolvable:$true] %s503
          %506 = dma.vmem_to_hbm [thread:$0]  %s502, 16, %s504, %s491
        $region72: #{tpu_custom_call.1} parent=55 // pred_fallthru
          _
      $region56: #{tpu_custom_call.1} parent=5 // pred_fallthru
        _
      %p507 = scmp.le.s32.totalorder 2, %s25
      // Predicated region
      $region73: #{tpu_custom_call.1} parent=5 // pred_check
        %p508 = pneg %p507
      $region74: #{tpu_custom_call.1} parent=5 // pred_check_branch
        %510 = sbr.rel (%p508) target = $region76
      $region75: #{tpu_custom_call.1} parent=5 // pred_region
        %s511 = ssub.s32 %s25, 2
        // Predicated region
        $region77: #{tpu_custom_call.1} parent=75 // pred_check
          %p512 = pneg %p248
        $region78: #{tpu_custom_call.1} parent=75 // pred_check_branch
          %514 = sbr.rel (%p512) target = $region80
        $region79: #{tpu_custom_call.1} parent=75 // pred_region
          %s515 = sand.u32 %s233, 1
          %s516 = scalar_lea.sflag [#allocation7], %s515
          %s517 = sand.u32 %s233, 1
          %s518 = scalar_lea.vmem [#allocation11], %s517
          %520 = dma.done %s516, 16
        $region80: #{tpu_custom_call.1} parent=75 // pred_fallthru
          _
      $region76: #{tpu_custom_call.1} parent=5 // pred_fallthru
        _
    $region6: #{tpu_custom_call.1} parent=1 // loop_footer
      %s29 = sadd.s32 1, %s25
    $region7: #{tpu_custom_call.1} parent=1 // loop_footer_branch
      %24 = sbr.rel target = $region3
    $region8: #{tpu_custom_call.1} parent=1 // loop_exit
      _
    %521 = vsyncpa [#allocation6], 1
    %s522 = scalar_lea.sflag [#allocation6], 1
    %523 = vsyncpa %s522, 1
    %524 = vsyncpa [#allocation9], 1
    %525 = vsyncpa [#allocation7], 1
    %s526 = scalar_lea.sflag [#allocation7], 1
    %527 = vsyncpa %s526, 1

</llo_original>
